<compile_context>
chip_gen: v6e
topology: v6e:2x2x1
jax: 0.10.0
libtpu: 0.0.40
codegen_flags: <defaults>
</compile_context>

<pallas_src>
import jax
import jax.numpy as jnp
import numpy as np
from jax.experimental import pallas as pl
from jax.experimental.pallas import tpu as pltpu

X_2D, Y_2D, W_2D, H_2D = 0, 1, 2, 3
CNS_2D = 0

LANES = 128
_EPS = 1e-6


def _round_up(x, m):
    return -(-x // m) * m


def _core_split(num_cores=None):
    """Return (n_cores, leading-axis semantic) for the current TPU generation."""
    kind = ""
    try:
        kind = jax.devices()[0].device_kind.lower()
    except Exception:  # pragma: no cover - defensive
        pass
    if num_cores is None:
        if "v7" in kind:
            num_cores = 2            # 2 TensorCores per chip
        elif ("v4" in kind) or ("v5p" in kind):
            num_cores = 2            # megacore: compiler splits a parallel axis
        else:
            num_cores = 1            # v5e / v6e / unknown: single TensorCore
    if num_cores <= 1:
        return 1, None
    if "v7" in kind:
        return num_cores, pltpu.CORE_PARALLEL
    return num_cores, pltpu.PARALLEL


def _make_kernel(tile_rows, m_valid, has_weight, has_quality, split_cores):
    """Kernel specialized on which optional streams exist."""
    fold = tile_rows // 8
    need_boundary_mask = has_quality or (not has_weight)

    def fold_add(out_ref, val):
        # (tile_rows, 128) -> (1, 8, 128) with VPU vreg adds; accumulate into
        # the resident output block (no per-step cross-lane XLU reduce).
        out_ref[...] += jnp.sum(val.reshape(fold, 8, LANES), axis=0,
                                keepdims=True)

    def kernel(*refs):
        it = iter(refs)
        box_ref = next(it)
        tgt_ref = next(it)
        w_ref = next(it) if has_weight else None
        cns_ref = next(it) if has_quality else None
        box_out = next(it)                       # (1, 8, 128) resident block
        cns_out = next(it) if has_quality else None

        if split_cores:
            c = pl.program_id(0)
            i = pl.program_id(1)
            tile_idx = c * pl.num_programs(1) + i
        else:
            i = pl.program_id(0)
            tile_idx = i

        @pl.when(i == 0)
        def _():
            box_out[...] = jnp.zeros_like(box_out)
            if has_quality:
                cns_out[...] = jnp.zeros_like(cns_out)

        bx = box_ref[X_2D].astype(jnp.float32)
        by = box_ref[Y_2D].astype(jnp.float32)
        bw = jnp.exp(box_ref[W_2D].astype(jnp.float32))
        bh = jnp.exp(box_ref[H_2D].astype(jnp.float32))
        tx = tgt_ref[X_2D].astype(jnp.float32)
        ty = tgt_ref[Y_2D].astype(jnp.float32)
        tw = jnp.exp(tgt_ref[W_2D].astype(jnp.float32))
        th = jnp.exp(tgt_ref[H_2D].astype(jnp.float32))

        # --- box loss: 1 - IoU on corner-format boxes ---
        iw = jnp.maximum(jnp.minimum(bx + bw, tx + tw) - jnp.maximum(bx, tx), 0.0)
        ih = jnp.maximum(jnp.minimum(by + bh, ty + th) - jnp.maximum(by, ty), 0.0)
        inter = iw * ih
        union = jnp.maximum(bw * bh + tw * th - inter, _EPS)
        r = pl.reciprocal(union, approx=True)
        r = r * (2.0 - union * r)                # one Newton refinement
        iou = inter * r
        box_term = 1.0 - iou
        if has_weight:
            box_term = box_term * w_ref[...]     # padded weight == 0

        if has_quality:
            # --- centerness: BCE(logit, exp(-||center diff||_2)) ---
            dcx = (bx + 0.5 * bw) - (tx + 0.5 * tw)
            dcy = (by + 0.5 * bh) - (ty + 0.5 * th)
            d2 = dcx * dcx + dcy * dcy
            dist = d2 * jax.lax.rsqrt(d2 + 1e-12)   # == sqrt(d2), single EUP op
            cns_target = jnp.exp(-dist)
            z = cns_ref[...]
            bce = (jnp.maximum(z, 0.0) - z * cns_target
                   + jnp.log(1.0 + jnp.exp(-jnp.abs(z))))

        if not need_boundary_mask:
            # weight stream is zero-padded -> padded boxes contribute nothing.
            fold_add(box_out, box_term)
        else:
            row0 = tile_idx * tile_rows
            is_full = (row0 + tile_rows) * LANES <= m_valid

            @pl.when(is_full)
            def _():
                fold_add(box_out, box_term)
                if has_quality:
                    fold_add(cns_out, bce)

            @pl.when(jnp.logical_not(is_full))
            def _():
                # Padding mask derived on-chip only for boundary tiles.
                lr = jax.lax.broadcasted_iota(jnp.int32, (tile_rows, LANES), 0)
                ln = jax.lax.broadcasted_iota(jnp.int32, (tile_rows, LANES), 1)
                gidx = (row0 + lr) * LANES + ln
                mask = (gidx < m_valid).astype(jnp.float32)
                fold_add(box_out, box_term if has_weight else box_term * mask)
                if has_quality:
                    fold_add(cns_out, bce * mask)

    return kernel


def _dense_forward(box, box_target, weight, avg_factor, suffix, quality):
    """Plain jnp path for small inputs (Pallas launch/repack overhead dominates)."""
    b = jnp.asarray(box, jnp.float32)
    t = jnp.asarray(box_target, jnp.float32)
    bw, bh = jnp.exp(b[..., W_2D]), jnp.exp(b[..., H_2D])
    tw, th = jnp.exp(t[..., W_2D]), jnp.exp(t[..., H_2D])
    bx, by = b[..., X_2D], b[..., Y_2D]
    tx, ty = t[..., X_2D], t[..., Y_2D]
    iw = jnp.maximum(jnp.minimum(bx + bw, tx + tw) - jnp.maximum(bx, tx), 0.0)
    ih = jnp.maximum(jnp.minimum(by + bh, ty + th) - jnp.maximum(by, ty), 0.0)
    inter = iw * ih
    union = jnp.maximum(bw * bh + tw * th - inter, _EPS)
    loss = 1.0 - inter / union
    if weight is not None:
        loss = loss * jnp.asarray(weight, jnp.float32)
    out = {f"loss_box{suffix}": jnp.sum(loss) / avg_factor}
    if quality is not None:
        dcx = (bx + 0.5 * bw) - (tx + 0.5 * tw)
        dcy = (by + 0.5 * bh) - (ty + 0.5 * th)
        cns_target = jnp.exp(-jnp.sqrt(dcx * dcx + dcy * dcy))
        z = jnp.asarray(quality, jnp.float32)[..., CNS_2D]
        bce = (jnp.maximum(z, 0.0) - z * cns_target
               + jnp.log(1.0 + jnp.exp(-jnp.abs(z))))
        out[f"loss_cns{suffix}"] = jnp.sum(bce) / avg_factor
    return out


def sparse_box2d_loss_iou(box, box_target, weight=None, avg_factor=None,
                          suffix="", quality=None, *,
                          stream_dtype=jnp.bfloat16, tile_rows_max=1024,
                          min_pallas_boxes=8192, num_cores=None):
    """box, box_target: (..., 4); weight: (...,) or None; quality: (..., Q) or None."""
    box = jnp.asarray(box)
    box_target = jnp.asarray(box_target)
    lead = box.shape[:-1]
    M = int(np.prod(lead)) if lead else 1
    has_weight = weight is not None
    has_quality = quality is not None

    if avg_factor is None:
        # TODO(synk): real module delegates normalization to the configured
        # mmcv loss (often sum(weight) / num positives); box count used here.
        avg_factor = float(max(M, 1))

    if M < min_pallas_boxes:
        return _dense_forward(box, box_target, weight, avg_factor, suffix, quality)

    ncores, lead_sem = _core_split(num_cores)

    # --- tile sizing: lane-dense tiles, padding kept well below ~10% ---
    r_needed = -(-M // LANES)                       # 128-lane rows needed
    r8 = _round_up(r_needed, 8)
    n_min = 4                                       # aim for >= 4 inner steps
    tile_rows = min(int(tile_rows_max),
                    _round_up(-(-r8 // (ncores * n_min)), 8))
    tile_rows = max(tile_rows - tile_rows % 8, 8)
    chunk = ncores * tile_rows
    Rp = _round_up(r8, chunk)
    Mp = Rp * LANES
    pad = Mp - M
    n_inner = Rp // chunk

    def plane(a):
        # (..., 4) -> component-major (4, Rp, 128) lane-dense planes in
        # stream_dtype (bf16 default -> half the kernel HBM read bytes).
        # TODO(synk): this pad+transpose is a separate XLA pass; eliding it
        # requires the producer to emit component-major (4, M) directly.
        a = jnp.reshape(a, (M, 4)).astype(stream_dtype)
        a = jnp.pad(a, ((0, pad), (0, 0)))
        return jnp.transpose(a, (1, 0)).reshape(4, Rp, LANES)

    def rows(a):
        a = jnp.reshape(jnp.asarray(a), (M,)).astype(jnp.float32)
        return jnp.pad(a, (0, pad)).reshape(Rp, LANES)

    split = ncores > 1
    if split:
        box_map = lambda c, i: (0, c * n_inner + i, 0)
        row_map = lambda c, i: (c * n_inner + i, 0)
        out_map = lambda c, i: (c, 0, 0)
        grid = (ncores, n_inner)
        semantics = (lead_sem, pltpu.ARBITRARY)
    else:
        box_map = lambda i: (0, i, 0)
        row_map = lambda i: (i, 0)
        out_map = lambda i: (0, 0, 0)
        grid = (n_inner,)
        semantics = (pltpu.ARBITRARY,)

    inputs = [plane(box), plane(box_target)]
    in_specs = [pl.BlockSpec((4, tile_rows, LANES), box_map),
                pl.BlockSpec((4, tile_rows, LANES), box_map)]
    if has_weight:
        inputs.append(rows(weight))
        in_specs.append(pl.BlockSpec((tile_rows, LANES), row_map))
    if has_quality:
        inputs.append(rows(jnp.asarray(quality)[..., CNS_2D]))
        in_specs.append(pl.BlockSpec((tile_rows, LANES), row_map))

    out_shapes = [jax.ShapeDtypeStruct((ncores, 8, LANES), jnp.float32)]
    out_specs = [pl.BlockSpec((1, 8, LANES), out_map)]
    if has_quality:
        out_shapes.append(jax.ShapeDtypeStruct((ncores, 8, LANES), jnp.float32))
        out_specs.append(pl.BlockSpec((1, 8, LANES), out_map))

    kernel = _make_kernel(tile_rows, M, has_weight, has_quality, split)

    sbytes = jnp.dtype(stream_dtype).itemsize
    bytes_accessed = 2 * 4 * Mp * sbytes + 2 * ncores * 8 * LANES * 4
    if has_weight:
        bytes_accessed += Mp * 4
    if has_quality:
        bytes_accessed += Mp * 4
    cost = pl.CostEstimate(
        flops=int(35 * Mp),
        transcendentals=int((5 + (4 if has_quality else 0)) * Mp),
        bytes_accessed=int(bytes_accessed))

    outs = pl.pallas_call(
        kernel,
        out_shape=tuple(out_shapes),
        grid_spec=pltpu.PrefetchScalarGridSpec(
            num_scalar_prefetch=0,
            grid=grid,
            in_specs=in_specs,
            out_specs=tuple(out_specs)),
        compiler_params=pltpu.CompilerParams(
            dimension_semantics=semantics,
            vmem_limit_bytes=32 * 1024 * 1024),
        cost_estimate=cost,
    )(*inputs)

    output = {f"loss_box{suffix}": jnp.sum(outs[0]) / avg_factor}
    if has_quality:
        output[f"loss_cns{suffix}"] = jnp.sum(outs[1]) / avg_factor
    return output


def _np_reference(box, box_target, weight, avg_factor, quality):
    """Independent float64 numpy reference of the module's forward pass."""
    b = np.asarray(box, np.float64)
    t = np.asarray(box_target, np.float64)
    bw, bh = np.exp(b[..., W_2D]), np.exp(b[..., H_2D])
    tw, th = np.exp(t[..., W_2D]), np.exp(t[..., H_2D])
    bx, by = b[..., X_2D], b[..., Y_2D]
    tx, ty = t[..., X_2D], t[..., Y_2D]
    iw = np.maximum(np.minimum(bx + bw, tx + tw) - np.maximum(bx, tx), 0.0)
    ih = np.maximum(np.minimum(by + bh, ty + th) - np.maximum(by, ty), 0.0)
    inter = iw * ih
    union = np.maximum(bw * bh + tw * th - inter, _EPS)
    loss = 1.0 - inter / union
    if weight is not None:
        loss = loss * np.asarray(weight, np.float64)
    out = {"loss_box": float(loss.sum() / avg_factor)}
    if quality is not None:
        dcx = (bx + 0.5 * bw) - (tx + 0.5 * tw)
        dcy = (by + 0.5 * bh) - (ty + 0.5 * th)
        cns_t = np.exp(-np.sqrt(dcx * dcx + dcy * dcy))
        z = np.asarray(quality, np.float64)[..., CNS_2D]
        bce = np.maximum(z, 0.0) - z * cns_t + np.log1p(np.exp(-np.abs(z)))
        out["loss_cns"] = float(bce.sum() / avg_factor)
    return out


if __name__ == "__main__":
    key = jax.random.PRNGKey(0)
    k1, k2, k3, k4, k5 = jax.random.split(key, 5)

    # --- Case A: tiny shape forced through the Pallas path, f32 streaming ---
    B, N = 2, 8
    box = 0.5 * jax.random.normal(k1, (B, N, 4), jnp.float32)
    tgt = box + 0.1 * jax.random.normal(k2, (B, N, 4), jnp.float32)
    weight = jax.random.uniform(k3, (B, N), jnp.float32)
    quality = jax.random.normal(k4, (B, N, 2), jnp.float32)
    af = float(B * N)

    out_a = sparse_box2d_loss_iou(box, tgt, weight=weight, avg_factor=af,
                                  quality=quality, stream_dtype=jnp.float32,
                                  min_pallas_boxes=0)
    out_a = jax.tree_util.tree_map(jax.block_until_ready, out_a)
    ref_a = _np_reference(box, tgt, weight, af, quality)
    assert np.isfinite(float(out_a["loss_box"])) and np.isfinite(float(out_a["loss_cns"]))
    assert np.allclose(float(out_a["loss_box"]), ref_a["loss_box"],
                       rtol=2e-3, atol=2e-3), (out_a["loss_box"], ref_a["loss_box"])
    assert np.allclose(float(out_a["loss_cns"]), ref_a["loss_cns"],
                       rtol=2e-3, atol=2e-3), (out_a["loss_cns"], ref_a["loss_cns"])

    # --- Case B: multi-tile (full + boundary tiles), default bf16 streaming ---
    B2, N2 = 2, 1000
    box2 = 0.5 * jax.random.normal(k5, (B2, N2, 4), jnp.float32)
    tgt2 = box2 + 0.1 * jax.random.normal(k2, (B2, N2, 4), jnp.float32)
    w2 = jax.random.uniform(k3, (B2, N2), jnp.float32)
    q2 = jax.random.normal(k4, (B2, N2, 2), jnp.float32)
    af2 = float(B2 * N2)
    out_b = sparse_box2d_loss_iou(box2, tgt2, weight=w2, avg_factor=af2,
                                  quality=q2, min_pallas_boxes=0)
    out_b = jax.tree_util.tree_map(jax.block_until_ready, out_b)
    ref_b = _np_reference(box2, tgt2, w2, af2, q2)
    assert np.allclose(float(out_b["loss_box"]), ref_b["loss_box"],
                       rtol=3e-2, atol=3e-3), (out_b["loss_box"], ref_b["loss_box"])
    assert np.allclose(float(out_b["loss_cns"]), ref_b["loss_cns"],
                       rtol=3e-2, atol=3e-3), (out_b["loss_cns"], ref_b["loss_cns"])

    # --- Case C: no weight / no quality (mask derived in-kernel, cns elided) ---
    out_c = sparse_box2d_loss_iou(box2, tgt2, avg_factor=af2,
                                  stream_dtype=jnp.float32, min_pallas_boxes=0)
    out_c = jax.tree_util.tree_map(jax.block_until_ready, out_c)
    ref_c = _np_reference(box2, tgt2, None, af2, None)
    assert "loss_cns" not in out_c
    assert np.allclose(float(out_c["loss_box"]), ref_c["loss_box"],
                       rtol=2e-3, atol=2e-3), (out_c["loss_box"], ref_c["loss_box"])

    # --- Case D: default small-input fallback (dense jnp path) ---
    out_d = sparse_box2d_loss_iou(box, tgt, weight=weight, avg_factor=af,
                                  quality=quality)
    out_d = jax.tree_util.tree_map(jax.block_until_ready, out_d)
    assert np.allclose(float(out_d["loss_box"]), ref_a["loss_box"],
                       rtol=2e-3, atol=2e-3)
    assert np.allclose(float(out_d["loss_cns"]), ref_a["loss_cns"],
                       rtol=2e-3, atol=2e-3)

    print("KERNEL_OK")
</pallas_src>

<mosaic_0001>
module attributes {stable_mosaic.version = 11 : i64} {
  func.func @kernel(%arg0: i32, %arg1: memref<4x8x128xf32, #tpu.memory_space<vmem>>, %arg2: memref<4x8x128xf32, #tpu.memory_space<vmem>>, %arg3: memref<8x128xf32, #tpu.memory_space<vmem>>, %arg4: memref<8x128xf32, #tpu.memory_space<vmem>>, %arg5: memref<1x8x128xf32, #tpu.memory_space<vmem>>, %arg6: memref<1x8x128xf32, #tpu.memory_space<vmem>>) attributes {dimension_semantics = [#tpu.dimension_semantics<arbitrary>], iteration_bounds = array<i64: 1>, scalar_prefetch = 0 : i64, scratch_operands = 0 : i64, tpu.core_type = #tpu.core_type<tc>, window_params = [{transform_indices = @transform_0, window_bounds = array<i64: 4, 8, 128>}, {transform_indices = @transform_1, window_bounds = array<i64: 4, 8, 128>}, {transform_indices = @transform_2, window_bounds = array<i64: 8, 128>}, {transform_indices = @transform_3, window_bounds = array<i64: 8, 128>}, {pipeline_mode = #tpu.pipeline_mode<synchronous>, transform_indices = @transform_4, window_bounds = array<i64: 1, 8, 128>}, {pipeline_mode = #tpu.pipeline_mode<synchronous>, transform_indices = @transform_5, window_bounds = array<i64: 1, 8, 128>}]} {
    %c0_i32 = arith.constant 0 : i32
    %0 = arith.cmpi eq, %arg0, %c0_i32 : i32
    %1 = arith.extui %0 : i1 to i32
    %c0_i32_0 = arith.constant 0 : i32
    %2 = arith.cmpi ne, %1, %c0_i32_0 : i32
    scf.if %2 {
      %cst_41 = arith.constant 0.000000e+00 : f32
      %100 = vector.broadcast %cst_41 : f32 to vector<1x8x128xf32>
      %c0_42 = arith.constant 0 : index
      %c0_43 = arith.constant 0 : index
      %c0_44 = arith.constant 0 : index
      %101 = vector.load %arg5[%c0_42, %c0_43, %c0_44] : memref<1x8x128xf32, #tpu.memory_space<vmem>>, vector<1x8x128xf32>
      tpu.vector_store %arg5[%c0_42, %c0_43, %c0_44], %100 {strides = array<i32>} : memref<1x8x128xf32, #tpu.memory_space<vmem>>, vector<1x8x128xf32>,
      %cst_45 = arith.constant 0.000000e+00 : f32
      %102 = vector.broadcast %cst_45 : f32 to vector<1x8x128xf32>
      %c0_46 = arith.constant 0 : index
      %c0_47 = arith.constant 0 : index
      %c0_48 = arith.constant 0 : index
      %103 = vector.load %arg6[%c0_46, %c0_47, %c0_48] : memref<1x8x128xf32, #tpu.memory_space<vmem>>, vector<1x8x128xf32>
      tpu.vector_store %arg6[%c0_46, %c0_47, %c0_48], %102 {strides = array<i32>} : memref<1x8x128xf32, #tpu.memory_space<vmem>>, vector<1x8x128xf32>,
    } else {
    }
    %c0 = arith.constant 0 : index
    %c0_1 = arith.constant 0 : index
    %c0_2 = arith.constant 0 : index
    %3 = vector.load %arg1[%c0, %c0_1, %c0_2] : memref<4x8x128xf32, #tpu.memory_space<vmem>>, vector<1x8x128xf32>
    %4 = vector.shape_cast %3 : vector<1x8x128xf32> to vector<8x128xf32>
    %c1 = arith.constant 1 : index
    %c0_3 = arith.constant 0 : index
    %c0_4 = arith.constant 0 : index
    %5 = vector.load %arg1[%c1, %c0_3, %c0_4] : memref<4x8x128xf32, #tpu.memory_space<vmem>>, vector<1x8x128xf32>
    %6 = vector.shape_cast %5 : vector<1x8x128xf32> to vector<8x128xf32>
    %c2 = arith.constant 2 : index
    %c0_5 = arith.constant 0 : index
    %c0_6 = arith.constant 0 : index
    %7 = vector.load %arg1[%c2, %c0_5, %c0_6] : memref<4x8x128xf32, #tpu.memory_space<vmem>>, vector<1x8x128xf32>
    %8 = vector.shape_cast %7 : vector<1x8x128xf32> to vector<8x128xf32>
    %9 = math.exp %8 : vector<8x128xf32>
    %c3 = arith.constant 3 : index
    %c0_7 = arith.constant 0 : index
    %c0_8 = arith.constant 0 : index
    %10 = vector.load %arg1[%c3, %c0_7, %c0_8] : memref<4x8x128xf32, #tpu.memory_space<vmem>>, vector<1x8x128xf32>
    %11 = vector.shape_cast %10 : vector<1x8x128xf32> to vector<8x128xf32>
    %12 = math.exp %11 : vector<8x128xf32>
    %c0_9 = arith.constant 0 : index
    %c0_10 = arith.constant 0 : index
    %c0_11 = arith.constant 0 : index
    %13 = vector.load %arg2[%c0_9, %c0_10, %c0_11] : memref<4x8x128xf32, #tpu.memory_space<vmem>>, vector<1x8x128xf32>
    %14 = vector.shape_cast %13 : vector<1x8x128xf32> to vector<8x128xf32>
    %c1_12 = arith.constant 1 : index
    %c0_13 = arith.constant 0 : index
    %c0_14 = arith.constant 0 : index
    %15 = vector.load %arg2[%c1_12, %c0_13, %c0_14] : memref<4x8x128xf32, #tpu.memory_space<vmem>>, vector<1x8x128xf32>
    %16 = vector.shape_cast %15 : vector<1x8x128xf32> to vector<8x128xf32>
    %c2_15 = arith.constant 2 : index
    %c0_16 = arith.constant 0 : index
    %c0_17 = arith.constant 0 : index
    %17 = vector.load %arg2[%c2_15, %c0_16, %c0_17] : memref<4x8x128xf32, #tpu.memory_space<vmem>>, vector<1x8x128xf32>
    %18 = vector.shape_cast %17 : vector<1x8x128xf32> to vector<8x128xf32>
    %19 = math.exp %18 : vector<8x128xf32>
    %c3_18 = arith.constant 3 : index
    %c0_19 = arith.constant 0 : index
    %c0_20 = arith.constant 0 : index
    %20 = vector.load %arg2[%c3_18, %c0_19, %c0_20] : memref<4x8x128xf32, #tpu.memory_space<vmem>>, vector<1x8x128xf32>
    %21 = vector.shape_cast %20 : vector<1x8x128xf32> to vector<8x128xf32>
    %22 = math.exp %21 : vector<8x128xf32>
    %23 = arith.addf %4, %9 : vector<8x128xf32>
    %24 = arith.addf %14, %19 : vector<8x128xf32>
    %25 = arith.minimumf %23, %24 : vector<8x128xf32>
    %26 = arith.maximumf %4, %14 : vector<8x128xf32>
    %27 = arith.subf %25, %26 : vector<8x128xf32>
    %cst = arith.constant 0.000000e+00 : f32
    %28 = vector.broadcast %cst : f32 to vector<8x128xf32>
    %29 = arith.maximumf %27, %28 : vector<8x128xf32>
    %30 = arith.addf %6, %12 : vector<8x128xf32>
    %31 = arith.addf %16, %22 : vector<8x128xf32>
    %32 = arith.minimumf %30, %31 : vector<8x128xf32>
    %33 = arith.maximumf %6, %16 : vector<8x128xf32>
    %34 = arith.subf %32, %33 : vector<8x128xf32>
    %cst_21 = arith.constant 0.000000e+00 : f32
    %35 = vector.broadcast %cst_21 : f32 to vector<8x128xf32>
    %36 = arith.maximumf %34, %35 : vector<8x128xf32>
    %37 = arith.mulf %29, %36 : vector<8x128xf32>
    %38 = arith.mulf %9, %12 : vector<8x128xf32>
    %39 = arith.mulf %19, %22 : vector<8x128xf32>
    %40 = arith.addf %38, %39 : vector<8x128xf32>
    %41 = arith.subf %40, %37 : vector<8x128xf32>
    %cst_22 = arith.constant 9.99999997E-7 : f32
    %42 = vector.broadcast %cst_22 : f32 to vector<8x128xf32>
    %43 = arith.maximumf %41, %42 : vector<8x128xf32>
    %44 = tpu.reciprocal %43 {approx = true} : vector<8x128xf32> -> vector<8x128xf32>
    %45 = arith.mulf %43, %44 : vector<8x128xf32>
    %cst_23 = arith.constant 2.000000e+00 : f32
    %46 = vector.broadcast %cst_23 : f32 to vector<8x128xf32>
    %47 = arith.subf %46, %45 : vector<8x128xf32>
    %48 = arith.mulf %44, %47 : vector<8x128xf32>
    %49 = arith.mulf %37, %48 : vector<8x128xf32>
    %cst_24 = arith.constant 1.000000e+00 : f32
    %50 = vector.broadcast %cst_24 : f32 to vector<8x128xf32>
    %51 = arith.subf %50, %49 : vector<8x128xf32>
    %c0_25 = arith.constant 0 : index
    %c0_26 = arith.constant 0 : index
    %52 = vector.load %arg3[%c0_25, %c0_26] : memref<8x128xf32, #tpu.memory_space<vmem>>, vector<8x128xf32>
    %53 = arith.mulf %51, %52 : vector<8x128xf32>
    %cst_27 = arith.constant 5.000000e-01 : f32
    %54 = vector.broadcast %cst_27 : f32 to vector<8x128xf32>
    %55 = arith.mulf %54, %9 : vector<8x128xf32>
    %56 = arith.addf %4, %55 : vector<8x128xf32>
    %cst_28 = arith.constant 5.000000e-01 : f32
    %57 = vector.broadcast %cst_28 : f32 to vector<8x128xf32>
    %58 = arith.mulf %57, %19 : vector<8x128xf32>
    %59 = arith.addf %14, %58 : vector<8x128xf32>
    %60 = arith.subf %56, %59 : vector<8x128xf32>
    %cst_29 = arith.constant 5.000000e-01 : f32
    %61 = vector.broadcast %cst_29 : f32 to vector<8x128xf32>
    %62 = arith.mulf %61, %12 : vector<8x128xf32>
    %63 = arith.addf %6, %62 : vector<8x128xf32>
    %cst_30 = arith.constant 5.000000e-01 : f32
    %64 = vector.broadcast %cst_30 : f32 to vector<8x128xf32>
    %65 = arith.mulf %64, %22 : vector<8x128xf32>
    %66 = arith.addf %16, %65 : vector<8x128xf32>
    %67 = arith.subf %63, %66 : vector<8x128xf32>
    %68 = arith.mulf %60, %60 : vector<8x128xf32>
    %69 = arith.mulf %67, %67 : vector<8x128xf32>
    %70 = arith.addf %68, %69 : vector<8x128xf32>
    %cst_31 = arith.constant 9.99999996E-13 : f32
    %71 = vector.broadcast %cst_31 : f32 to vector<8x128xf32>
    %72 = arith.addf %70, %71 : vector<8x128xf32>
    %73 = math.rsqrt %72 : vector<8x128xf32>
    %74 = arith.mulf %70, %73 : vector<8x128xf32>
    %cst_32 = arith.constant 0.000000e+00 : f32
    %75 = vector.broadcast %cst_32 : f32 to vector<8x128xf32>
    %76 = arith.subf %75, %74 : vector<8x128xf32>
    %77 = math.exp %76 : vector<8x128xf32>
    %c0_33 = arith.constant 0 : index
    %c0_34 = arith.constant 0 : index
    %78 = vector.load %arg4[%c0_33, %c0_34] : memref<8x128xf32, #tpu.memory_space<vmem>>, vector<8x128xf32>
    %cst_35 = arith.constant 0.000000e+00 : f32
    %79 = vector.broadcast %cst_35 : f32 to vector<8x128xf32>
    %80 = arith.maximumf %78, %79 : vector<8x128xf32>
    %81 = arith.mulf %78, %77 : vector<8x128xf32>
    %82 = arith.subf %80, %81 : vector<8x128xf32>
    %83 = math.absf %78 : vector<8x128xf32>
    %cst_36 = arith.constant 0.000000e+00 : f32
    %84 = vector.broadcast %cst_36 : f32 to vector<8x128xf32>
    %85 = arith.subf %84, %83 : vector<8x128xf32>
    %86 = math.exp %85 : vector<8x128xf32>
    %cst_37 = arith.constant 1.000000e+00 : f32
    %87 = vector.broadcast %cst_37 : f32 to vector<8x128xf32>
    %88 = arith.addf %87, %86 : vector<8x128xf32>
    %89 = math.log %88 : vector<8x128xf32>
    %90 = arith.addf %82, %89 : vector<8x128xf32>
    %c8_i32 = arith.constant 8 : i32
    %91 = arith.muli %arg0, %c8_i32 : i32
    %c8_i32_38 = arith.constant 8 : i32
    %92 = arith.addi %91, %c8_i32_38 : i32
    %c128_i32 = arith.constant 128 : i32
    %93 = arith.muli %92, %c128_i32 : i32
    %c16_i32 = arith.constant 16 : i32
    %94 = arith.cmpi sle, %93, %c16_i32 : i32
    %95 = arith.extui %94 : i1 to i32
    %c0_i32_39 = arith.constant 0 : i32
    %96 = arith.cmpi ne, %95, %c0_i32_39 : i32
    scf.if %96 {
      %c0_41 = arith.constant 0 : index
      %c0_42 = arith.constant 0 : index
      %c0_43 = arith.constant 0 : index
      %100 = vector.load %arg5[%c0_41, %c0_42, %c0_43] : memref<1x8x128xf32, #tpu.memory_space<vmem>>, vector<1x8x128xf32>
      %101 = vector.shape_cast %53 : vector<8x128xf32> to vector<1x8x128xf32>
      %cst_44 = arith.constant dense<0.000000e+00> : vector<8x128xf32>
      %102 = vector.multi_reduction <add>, %101, %cst_44 [0] : vector<1x8x128xf32> to vector<8x128xf32>
      %103 = vector.shape_cast %102 : vector<8x128xf32> to vector<1x8x128xf32>
      %104 = arith.addf %100, %103 : vector<1x8x128xf32>
      %c0_45 = arith.constant 0 : index
      %c0_46 = arith.constant 0 : index
      %c0_47 = arith.constant 0 : index
      %105 = vector.load %arg5[%c0_45, %c0_46, %c0_47] : memref<1x8x128xf32, #tpu.memory_space<vmem>>, vector<1x8x128xf32>
      tpu.vector_store %arg5[%c0_45, %c0_46, %c0_47], %104 {strides = array<i32>} : memref<1x8x128xf32, #tpu.memory_space<vmem>>, vector<1x8x128xf32>,
      %c0_48 = arith.constant 0 : index
      %c0_49 = arith.constant 0 : index
      %c0_50 = arith.constant 0 : index
      %106 = vector.load %arg6[%c0_48, %c0_49, %c0_50] : memref<1x8x128xf32, #tpu.memory_space<vmem>>, vector<1x8x128xf32>
      %107 = vector.shape_cast %90 : vector<8x128xf32> to vector<1x8x128xf32>
      %cst_51 = arith.constant dense<0.000000e+00> : vector<8x128xf32>
      %108 = vector.multi_reduction <add>, %107, %cst_51 [0] : vector<1x8x128xf32> to vector<8x128xf32>
      %109 = vector.shape_cast %108 : vector<8x128xf32> to vector<1x8x128xf32>
      %110 = arith.addf %106, %109 : vector<1x8x128xf32>
      %c0_52 = arith.constant 0 : index
      %c0_53 = arith.constant 0 : index
      %c0_54 = arith.constant 0 : index
      %111 = vector.load %arg6[%c0_52, %c0_53, %c0_54] : memref<1x8x128xf32, #tpu.memory_space<vmem>>, vector<1x8x128xf32>
      tpu.vector_store %arg6[%c0_52, %c0_53, %c0_54], %110 {strides = array<i32>} : memref<1x8x128xf32, #tpu.memory_space<vmem>>, vector<1x8x128xf32>,
    } else {
    }
    %true = arith.constant true
    %97 = arith.xori %94, %true : i1
    %98 = arith.extui %97 : i1 to i32
    %c0_i32_40 = arith.constant 0 : i32
    %99 = arith.cmpi ne, %98, %c0_i32_40 : i32
    scf.if %99 {
      %100 = tpu.iota {dimensions = array<i32: 0>} : vector<8x128xi32>
      %101 = tpu.iota {dimensions = array<i32: 1>} : vector<8x128xi32>
      %102 = vector.broadcast %91 : i32 to vector<8x128xi32>
      %103 = arith.addi %102, %100 : vector<8x128xi32>
      %c128_i32_41 = arith.constant 128 : i32
      %104 = vector.broadcast %c128_i32_41 : i32 to vector<8x128xi32>
      %105 = arith.muli %103, %104 : vector<8x128xi32>
      %106 = arith.addi %105, %101 : vector<8x128xi32>
      %c16_i32_42 = arith.constant 16 : i32
      %107 = vector.broadcast %c16_i32_42 : i32 to vector<8x128xi32>
      %108 = arith.cmpi slt, %106, %107 : vector<8x128xi32>
      %109 = arith.extui %108 : vector<8x128xi1> to vector<8x128xi32>
      %110 = arith.sitofp %109 : vector<8x128xi32> to vector<8x128xf32>
      %c0_43 = arith.constant 0 : index
      %c0_44 = arith.constant 0 : index
      %c0_45 = arith.constant 0 : index
      %111 = vector.load %arg5[%c0_43, %c0_44, %c0_45] : memref<1x8x128xf32, #tpu.memory_space<vmem>>, vector<1x8x128xf32>
      %112 = vector.shape_cast %53 : vector<8x128xf32> to vector<1x8x128xf32>
      %cst_46 = arith.constant dense<0.000000e+00> : vector<8x128xf32>
      %113 = vector.multi_reduction <add>, %112, %cst_46 [0] : vector<1x8x128xf32> to vector<8x128xf32>
      %114 = vector.shape_cast %113 : vector<8x128xf32> to vector<1x8x128xf32>
      %115 = arith.addf %111, %114 : vector<1x8x128xf32>
      %c0_47 = arith.constant 0 : index
      %c0_48 = arith.constant 0 : index
      %c0_49 = arith.constant 0 : index
      %116 = vector.load %arg5[%c0_47, %c0_48, %c0_49] : memref<1x8x128xf32, #tpu.memory_space<vmem>>, vector<1x8x128xf32>
      tpu.vector_store %arg5[%c0_47, %c0_48, %c0_49], %115 {strides = array<i32>} : memref<1x8x128xf32, #tpu.memory_space<vmem>>, vector<1x8x128xf32>,
      %117 = arith.mulf %90, %110 : vector<8x128xf32>
      %c0_50 = arith.constant 0 : index
      %c0_51 = arith.constant 0 : index
      %c0_52 = arith.constant 0 : index
      %118 = vector.load %arg6[%c0_50, %c0_51, %c0_52] : memref<1x8x128xf32, #tpu.memory_space<vmem>>, vector<1x8x128xf32>
      %119 = vector.shape_cast %117 : vector<8x128xf32> to vector<1x8x128xf32>
      %cst_53 = arith.constant dense<0.000000e+00> : vector<8x128xf32>
      %120 = vector.multi_reduction <add>, %119, %cst_53 [0] : vector<1x8x128xf32> to vector<8x128xf32>
      %121 = vector.shape_cast %120 : vector<8x128xf32> to vector<1x8x128xf32>
      %122 = arith.addf %118, %121 : vector<1x8x128xf32>
      %c0_54 = arith.constant 0 : index
      %c0_55 = arith.constant 0 : index
      %c0_56 = arith.constant 0 : index
      %123 = vector.load %arg6[%c0_54, %c0_55, %c0_56] : memref<1x8x128xf32, #tpu.memory_space<vmem>>, vector<1x8x128xf32>
      tpu.vector_store %arg6[%c0_54, %c0_55, %c0_56], %122 {strides = array<i32>} : memref<1x8x128xf32, #tpu.memory_space<vmem>>, vector<1x8x128xf32>,
    } else {
    }
    return
  }
  func.func @transform_0(%arg0: i32) -> (i32, i32, i32) {
    %c0_i32 = arith.constant 0 : i32
    %c0_i32_0 = arith.constant 0 : i32
    %c0_i32_1 = arith.constant 0 : i32
    return %c0_i32, %arg0, %c0_i32_0 : i32, i32, i32
  }
  func.func @transform_1(%arg0: i32) -> (i32, i32, i32) {
    %c0_i32 = arith.constant 0 : i32
    %c0_i32_0 = arith.constant 0 : i32
    %c0_i32_1 = arith.constant 0 : i32
    return %c0_i32, %arg0, %c0_i32_0 : i32, i32, i32
  }
  func.func @transform_2(%arg0: i32) -> (i32, i32) {
    %c0_i32 = arith.constant 0 : i32
    %c0_i32_0 = arith.constant 0 : i32
    return %arg0, %c0_i32 : i32, i32
  }
  func.func @transform_3(%arg0: i32) -> (i32, i32) {
    %c0_i32 = arith.constant 0 : i32
    %c0_i32_0 = arith.constant 0 : i32
    return %arg0, %c0_i32 : i32, i32
  }
  func.func @transform_4(%arg0: i32) -> (i32, i32, i32) {
    %c0_i32 = arith.constant 0 : i32
    %c0_i32_0 = arith.constant 0 : i32
    %c0_i32_1 = arith.constant 0 : i32
    %c0_i32_2 = arith.constant 0 : i32
    return %c0_i32, %c0_i32_0, %c0_i32_1 : i32, i32, i32
  }
  func.func @transform_5(%arg0: i32) -> (i32, i32, i32) {
    %c0_i32 = arith.constant 0 : i32
    %c0_i32_0 = arith.constant 0 : i32
    %c0_i32_1 = arith.constant 0 : i32
    %c0_i32_2 = arith.constant 0 : i32
    return %c0_i32, %c0_i32_0, %c0_i32_1 : i32, i32, i32
  }
}

</mosaic_0001>

<llo_original>
// kernel: tpu_custom_call.1
$region0: #{tpu_custom_call.1}
  #allocation0 [shape = 'u32[]', space=smem, size = 0x4, offset = 0x4, fixed_abs, tag = 'smem constant byte address 0x4 - core index']
  #allocation1 [shape = 'u32[144,128]{1,0:T(1,128)}', space=vmem, size = 0x12000, scoped, tag = 'internal scratch']
  %s0 = inlined_call_operand.hbm [shape: f32[4,8,128], index: 0, kind: input, shape index: {}]
  %s1 = inlined_call_operand.hbm [shape: f32[4,8,128], index: 1, kind: input, shape index: {}]
  %s2 = inlined_call_operand.hbm [shape: f32[8,128], index: 2, kind: input, shape index: {}]
  %s3 = inlined_call_operand.hbm [shape: f32[8,128], index: 3, kind: input, shape index: {}]
  %s4 = inlined_call_operand.hbm [shape: f32[1,8,128], index: 4, kind: output, shape index: {0}]
  %s5 = inlined_call_operand.hbm [shape: f32[1,8,128], index: 5, kind: output, shape index: {1}]
  %6 = xla_tuple %s4, %s5
  %s7 = sld [smem:[#allocation0]]
  $region62: #{tpu_custom_call.1} parent=0
    _
  %s9 = ssub.s32 1, %s7
  %s10 = scalar_select 0, %s9, %s7
  $region1: #{tpu_custom_call.1} parent=0
    #allocation2 [shape = 'u8[16384]{0}', space=vmem, size = 0x4000, scoped, tag = 'input window, operand 0, single buffered']
    #allocation3 [shape = 's32[1]{0}', space=sflag, size = 0x4, scoped, tag = 'scoped memory for tpu_custom_call.1']
    #allocation4 [shape = 's32[1]{0}', space=sflag, size = 0x4, scoped, tag = 'scoped memory for tpu_custom_call.1']
    #allocation5 [shape = 'u8[16384]{0}', space=vmem, size = 0x4000, scoped, tag = 'input window, operand 1, single buffered']
    #allocation6 [shape = 's32[1]{0}', space=sflag, size = 0x4, scoped, tag = 'scoped memory for tpu_custom_call.1']
    #allocation7 [shape = 'u8[4096]{0}', space=vmem, size = 0x1000, scoped, tag = 'input window, operand 2, single buffered']
    #allocation8 [shape = 'u8[4096]{0}', space=vmem, size = 0x1000, scoped, tag = 'input window, operand 3, single buffered']
    #allocation9 [shape = 's32[1]{0}', space=sflag, size = 0x4, scoped, tag = 'scoped memory for tpu_custom_call.1']
    #allocation10 [shape = 'u8[4096]{0}', space=vmem, size = 0x1000, scoped, tag = 'output window, operand 0, single buffered']
    #allocation11 [shape = 'u8[4096]{0}', space=vmem, size = 0x1000, scoped, tag = 'output window, operand 1, single buffered']
    #allocation12 [shape = 's32[1]{0}', space=sflag, size = 0x4, scoped, tag = 'scoped memory for tpu_custom_call.1']
    %11 = vsyncpa [#allocation3], 0
    %12 = vsyncpa [#allocation6], 0
    %13 = vsyncpa [#allocation9], 0
    %14 = vsyncpa [#allocation4], 0
    %15 = vsyncpa [#allocation12], 0
    // Predicated region
    $region2: #{tpu_custom_call.1} parent=1 // pred_check
      _
    $region3: #{tpu_custom_call.1} parent=1 // pred_check_branch
      %17 = sbr.rel (0) target = $region5
    $region4: #{tpu_custom_call.1} parent=1 // pred_region
      %s19 = ssub.s32 512, 512
      %20 = vsyncadd [#allocation3], %s19
      %s21 = sshll.u32 [#allocation2], 4
      %s22 = int_to_ptr.vmem [resolvable:$true] %s21
      %27 = dma.hbm_to_vmem [thread:$0]  %s0, 512, %s22, [#allocation3], 128, 128, 8
    $region5: #{tpu_custom_call.1} parent=1 // pred_fallthru
      _
    // Predicated region
    $region6: #{tpu_custom_call.1} parent=1 // pred_check
      _
    $region7: #{tpu_custom_call.1} parent=1 // pred_check_branch
      %29 = sbr.rel (0) target = $region9
    $region8: #{tpu_custom_call.1} parent=1 // pred_region
      %s31 = ssub.s32 512, 512
      %32 = vsyncadd [#allocation6], %s31
      %s33 = sshll.u32 [#allocation5], 4
      %s34 = int_to_ptr.vmem [resolvable:$true] %s33
      %39 = dma.hbm_to_vmem [thread:$0]  %s1, 512, %s34, [#allocation6], 128, 128, 8
    $region9: #{tpu_custom_call.1} parent=1 // pred_fallthru
      _
    // Predicated region
    $region10: #{tpu_custom_call.1} parent=1 // pred_check
      _
    $region11: #{tpu_custom_call.1} parent=1 // pred_check_branch
      %41 = sbr.rel (0) target = $region13
    $region12: #{tpu_custom_call.1} parent=1 // pred_region
      %s43 = ssub.s32 128, 128
      %44 = vsyncadd [#allocation6], %s43
      %s46 = sshll.u32 [#allocation7], 4
      %s47 = int_to_ptr.vmem [resolvable:$true] %s46
      %49 = dma.hbm_to_vmem [thread:$0]  %s2, 128, %s47, [#allocation6]
    $region13: #{tpu_custom_call.1} parent=1 // pred_fallthru
      _
    // Predicated region
    $region14: #{tpu_custom_call.1} parent=1 // pred_check
      _
    $region15: #{tpu_custom_call.1} parent=1 // pred_check_branch
      %51 = sbr.rel (0) target = $region17
    $region16: #{tpu_custom_call.1} parent=1 // pred_region
      %s53 = ssub.s32 128, 128
      %54 = vsyncadd [#allocation9], %s53
      %s56 = sshll.u32 [#allocation8], 4
      %s57 = int_to_ptr.vmem [resolvable:$true] %s56
      %59 = dma.hbm_to_vmem [thread:$0]  %s3, 128, %s57, [#allocation9]
    $region17: #{tpu_custom_call.1} parent=1 // pred_fallthru
      _
    // Predicated region
    $region18: #{tpu_custom_call.1} parent=1 // pred_check
      _
    $region19: #{tpu_custom_call.1} parent=1 // pred_check_branch
      %61 = sbr.rel (0) target = $region21
    $region20: #{tpu_custom_call.1} parent=1 // pred_region
      %62 = dma.done [#allocation3], 512
    $region21: #{tpu_custom_call.1} parent=1 // pred_fallthru
      _
    // Predicated region
    $region22: #{tpu_custom_call.1} parent=1 // pred_check
      _
    $region23: #{tpu_custom_call.1} parent=1 // pred_check_branch
      %64 = sbr.rel (0) target = $region25
    $region24: #{tpu_custom_call.1} parent=1 // pred_region
      %65 = dma.done [#allocation6], 512
    $region25: #{tpu_custom_call.1} parent=1 // pred_fallthru
      _
    // Predicated region
    $region26: #{tpu_custom_call.1} parent=1 // pred_check
      _
    $region27: #{tpu_custom_call.1} parent=1 // pred_check_branch
      %67 = sbr.rel (0) target = $region29
    $region28: #{tpu_custom_call.1} parent=1 // pred_region
      %68 = dma.done [#allocation6], 128
    $region29: #{tpu_custom_call.1} parent=1 // pred_fallthru
      _
    // Predicated region
    $region30: #{tpu_custom_call.1} parent=1 // pred_check
      _
    $region31: #{tpu_custom_call.1} parent=1 // pred_check_branch
      %70 = sbr.rel (0) target = $region33
    $region32: #{tpu_custom_call.1} parent=1 // pred_region
      %71 = dma.done [#allocation9], 128
    $region33: #{tpu_custom_call.1} parent=1 // pred_fallthru
      _
    %p72 = scmp.eq.s32.totalorder 0, 0
    // Predicated region
    $region34: #{tpu_custom_call.1} parent=1 // pred_check
      %p73 = pneg %p72
    $region35: #{tpu_custom_call.1} parent=1 // pred_check_branch
      %75 = sbr.rel (%p73) target = $region37
    $region36: #{tpu_custom_call.1} parent=1 // pred_region
      %76 = vst [vmem:[#allocation10] sm:$0xff] 0.0
      %77 = vst [vmem:[#allocation11] sm:$0xff] 0.0
    $region37: #{tpu_custom_call.1} parent=1 // pred_fallthru
      _
    %v78 = vld [vmem:[#allocation2] sm:$0xff]
    %s79 = scalar_lea.vmem [#allocation2], 8
    %v80 = vld [vmem:[%s79] sm:$0xff]
    %s81 = scalar_lea.vmem [#allocation2], 16
    %v82 = vld [vmem:[%s81] sm:$0xff]
    %v83 = vmul.f32 %v82, 1.442695
    %v84 = vpow.pop %v83
    %s85 = scalar_lea.vmem [#allocation2], 24
    %v86 = vld [vmem:[%s85] sm:$0xff]
    %v87 = vmul.f32 %v86, 1.442695
    %v88 = vpow.pop %v87
    %v89 = vld [vmem:[#allocation5] sm:$0xff]
    %s90 = scalar_lea.vmem [#allocation5], 8
    %v91 = vld [vmem:[%s90] sm:$0xff]
    %s92 = scalar_lea.vmem [#allocation5], 16
    %v93 = vld [vmem:[%s92] sm:$0xff]
    %v94 = vmul.f32 %v93, 1.442695
    %v95 = vpow.pop %v94
    %s96 = scalar_lea.vmem [#allocation5], 24
    %v97 = vld [vmem:[%s96] sm:$0xff]
    %v98 = vmul.f32 %v97, 1.442695
    %v99 = vpow.pop %v98
    %v100 = vadd.f32 %v78, %v84
    %v101 = vadd.f32 %v89, %v95
    %v102 = vmin.f32 %v100, %v101
    %v103 = vmax.f32 %v78, %v89
    %v104 = vsub.f32 %v102, %v103
    %v105 = vmax.f32 %v104, 0.0
    %v106 = vadd.f32 %v80, %v88
    %v107 = vadd.f32 %v91, %v99
    %v108 = vmin.f32 %v106, %v107
    %v109 = vmax.f32 %v80, %v91
    %v110 = vsub.f32 %v108, %v109
    %v111 = vmax.f32 %v110, 0.0
    %v112 = vmul.f32 %v105, %v111
    %v113 = vmul.f32 %v84, %v88
    %v114 = vmul.f32 %v95, %v99
    %v115 = vadd.f32 %v113, %v114
    %v116 = vsub.f32 %v115, %v112
    %v117 = vmax.f32 %v116, 1e-06
    %v118 = vrcp.pop %v117
    %v119 = vmul.f32 %v117, %v118
    %v120 = vsub.f32 2.0, %v119
    %v121 = vmul.f32 %v118, %v120
    %v122 = vmul.f32 %v112, %v121
    %v123 = vsub.f32 1.0, %v122
    %v124 = vld [vmem:[#allocation7] sm:$0xff]
    %v125 = vmul.f32 %v123, %v124
    %v126 = vmul.f32 %v84, 0.5
    %v127 = vadd.f32 %v78, %v126
    %v128 = vmul.f32 %v95, 0.5
    %v129 = vadd.f32 %v89, %v128
    %v130 = vsub.f32 %v127, %v129
    %v131 = vmul.f32 %v88, 0.5
    %v132 = vadd.f32 %v80, %v131
    %v133 = vmul.f32 %v99, 0.5
    %v134 = vadd.f32 %v91, %v133
    %v135 = vsub.f32 %v132, %v134
    %v136 = vmul.f32 %v130, %v130
    %v137 = vmul.f32 %v135, %v135
    %v138 = vadd.f32 %v136, %v137
    %v139 = vadd.f32 %v138, 1e-12
    %v140 = vrsqrt.pop %v139
    %v141 = vmul.f32 %v138, %v140
    %v142 = vsub.f32 0.0, %v141
    %v143 = vmul.f32 %v142, 1.442695
    %v144 = vpow.pop %v143
    %v145 = vld [vmem:[#allocation8] sm:$0xff]
    %v146 = vmax.f32 %v145, 0.0
    %v147 = vmul.f32 %v145, %v144
    %v148 = vsub.f32 %v146, %v147
    %v149 = vand.u32 2147483647, %v145
    %v150 = vsub.f32 0.0, %v149
    %v151 = vmul.f32 %v150, 1.442695
    %v152 = vpow.pop %v151
    %v153 = vadd.f32 %v152, 1.0
    %v154 = vlog2.pop %v153
    %v155 = vmul.f32 %v154, 0.6931472
    %v156 = vadd.f32 %v148, %v155
    %s157 = smul.u32 0, 8
    %s158 = sadd.s32 %s157, 8
    %s159 = smul.u32 %s158, 128
    %p160 = scmp.le.s32.totalorder %s159, 16
    // Predicated region
    $region38: #{tpu_custom_call.1} parent=1 // pred_check
      %p161 = pneg %p160
    $region39: #{tpu_custom_call.1} parent=1 // pred_check_branch
      %163 = sbr.rel (%p161) target = $region41
    $region40: #{tpu_custom_call.1} parent=1 // pred_region
      %v164 = vld [vmem:[#allocation10] sm:$0xff]
      %v165 = vadd.f32 %v125, 0.0
      %v166 = vadd.f32 %v164, %v165
      %167 = vst [vmem:[#allocation10] sm:$0xff] %v166
      %v168 = vld [vmem:[#allocation11] sm:$0xff]
      %v169 = vadd.f32 %v156, 0.0
      %v170 = vadd.f32 %v168, %v169
      %171 = vst [vmem:[#allocation11] sm:$0xff] %v170
    $region41: #{tpu_custom_call.1} parent=1 // pred_fallthru
      _
    %p172 = scmp.gt.s32.totalorder %s159, 16
    // Predicated region
    $region42: #{tpu_custom_call.1} parent=1 // pred_check
      %p173 = pneg %p172
    $region43: #{tpu_custom_call.1} parent=1 // pred_check_branch
      %175 = sbr.rel (%p173) target = $region45
    $region44: #{tpu_custom_call.1} parent=1 // pred_region
      %v176 = vlaneseq
      %v177 = vshrl.u32 %v176, 7
      %v178 = vlaneseq
      %v179 = vand.u32 %v178, 127
      %v180 = vstv %s157
      %v181 = vadd.s32 %v180, %v177
      %v182 = vmul.u32 %v181, 128
      %v183 = vadd.s32 %v182, %v179
      %vm184 = vcmp.lt.s32.totalorder %v183, 16
      %v185 = vsel %vm184, 1, 0
      %v186 = vcvt.s32.f32 %v185
      %v187 = vld [vmem:[#allocation10] sm:$0xff]
      %v188 = vadd.f32 %v125, 0.0
      %v189 = vadd.f32 %v187, %v188
      %190 = vst [vmem:[#allocation10] sm:$0xff] %v189
      %v191 = vmul.f32 %v156, %v186
      %v192 = vld [vmem:[#allocation11] sm:$0xff]
      %v193 = vadd.f32 %v191, 0.0
      %v194 = vadd.f32 %v192, %v193
      %195 = vst [vmem:[#allocation11] sm:$0xff] %v194
    $region45: #{tpu_custom_call.1} parent=1 // pred_fallthru
      _
    // Predicated region
    $region46: #{tpu_custom_call.1} parent=1 // pred_check
      _
    $region47: #{tpu_custom_call.1} parent=1 // pred_check_branch
      %197 = sbr.rel (0) target = $region49
    $region48: #{tpu_custom_call.1} parent=1 // pred_region
      %s199 = ssub.s32 128, 128
      %200 = vsyncadd [#allocation4], %s199
      %s202 = sshll.u32 [#allocation10], 4
      %s203 = int_to_ptr.vmem [resolvable:$true] %s202
      %205 = dma.vmem_to_hbm [thread:$0]  %s203, 128, %s4, [#allocation4]
    $region49: #{tpu_custom_call.1} parent=1 // pred_fallthru
      _
    // Predicated region
    $region50: #{tpu_custom_call.1} parent=1 // pred_check
      _
    $region51: #{tpu_custom_call.1} parent=1 // pred_check_branch
      %207 = sbr.rel (0) target = $region53
    $region52: #{tpu_custom_call.1} parent=1 // pred_region
      %s209 = ssub.s32 128, 128
      %210 = vsyncadd [#allocation12], %s209
      %s212 = sshll.u32 [#allocation11], 4
      %s213 = int_to_ptr.vmem [resolvable:$true] %s212
      %215 = dma.vmem_to_hbm [thread:$0]  %s213, 128, %s5, [#allocation12]
    $region53: #{tpu_custom_call.1} parent=1 // pred_fallthru
      _
    // Predicated region
    $region54: #{tpu_custom_call.1} parent=1 // pred_check
      _
    $region55: #{tpu_custom_call.1} parent=1 // pred_check_branch
      %217 = sbr.rel (0) target = $region57
    $region56: #{tpu_custom_call.1} parent=1 // pred_region
      %218 = dma.done [#allocation4], 128
    $region57: #{tpu_custom_call.1} parent=1 // pred_fallthru
      _
    // Predicated region
    $region58: #{tpu_custom_call.1} parent=1 // pred_check
      _
    $region59: #{tpu_custom_call.1} parent=1 // pred_check_branch
      %220 = sbr.rel (0) target = $region61
    $region60: #{tpu_custom_call.1} parent=1 // pred_region
      %221 = dma.done [#allocation12], 128
    $region61: #{tpu_custom_call.1} parent=1 // pred_fallthru
      _
    %222 = vsyncpa [#allocation3], 1
    %223 = vsyncpa [#allocation6], 1
    %224 = vsyncpa [#allocation9], 1
    %225 = vsyncpa [#allocation4], 1
    %226 = vsyncpa [#allocation12], 1

</llo_original>
